<compile_context>
chip_gen: v6e
topology: v6e:2x2x1
jax: 0.10.0
libtpu: 0.0.40
codegen_flags: <defaults>
</compile_context>

<pallas_src>
import math

import jax
import jax.numpy as jnp
from jax.experimental import pallas as pl
from jax.experimental.pallas import tpu as pltpu


def _patch_embed_kernel(x_ref, w_ref, pe_ref, o_ref):
    """x_ref: (TR, K)  w_ref: (K, N)  pe_ref: (TR, N)  o_ref: (TR, N)."""
    acc = jnp.dot(x_ref[...], w_ref[...],
                  preferred_element_type=jnp.float32,
                  precision=jax.lax.Precision.HIGHEST)      # MXU, f32 accumulate
    acc = acc + pe_ref[...].astype(jnp.float32)             # positional add (VPU)
    o_ref[...] = acc.astype(o_ref.dtype)                    # cast-on-store


def _round_up(a, b):
    return -(-a // b) * b


def _choose_groups_per_tile(G, P, K, N, out_itemsize, *,
                            target_out_tile_bytes, vmem_budget_bytes):
    """Pick TG (groups per grid step): ~target-sized output tiles, working set
    (double-buffered in/out + resident pe/w) within the scoped-VMEM budget,
    >= 2 grid steps when possible (v7x dual-TC), TG*P rows sublane-aligned."""
    lanes_k = _round_up(max(K, 1), 128)
    lanes_n = _round_up(max(N, 1), 128)
    per_g_x = P * lanes_k * 4                        # lane-padded f32 input tile
    per_g_out = P * lanes_n * out_itemsize
    per_g_pe = P * lanes_n * 4
    w_bytes = _round_up(max(K, 1), 8) * lanes_n * 4
    per_g_ws = 2 * per_g_out + 2 * per_g_x + per_g_pe

    tg_target = max(1, target_out_tile_bytes // max(per_g_out, 1))
    tg_vmem = max(1, (vmem_budget_bytes - w_bytes) // max(per_g_ws, 1))
    tg = min(G, tg_target, tg_vmem)

    # v7x has two TensorCores: keep at least 2 grid steps when G allows it.
    if G > 1:
        tg = min(tg, -(-G // 2))

    # Sublane constraint: TG*P must be a multiple of 8 unless the block spans
    # the full row axis.
    if tg < G:
        step = 8 // math.gcd(P, 8)
        tg = max(step, (tg // step) * step)
        if tg >= G:
            tg = G
    return tg


def patch_embedding(x, weight, pos_emb, *, patch_len, stride, padding,
                    out_dtype=None,
                    target_out_tile_bytes=2 * 1024 * 1024,
                    vmem_budget_bytes=12 * 1024 * 1024):
    """Pallas implementation of PatchEmbedding.forward (eval mode).

    x:       (B, L, C) float   (batch, seq_len, n_vars)
    weight:  (d_model, patch_len) = nn.Linear(patch_len, d_model, bias=False).weight
    pos_emb: (max_len, d_model)   = nn.Embedding(max_len, d_model).weight
             (the module's add requires max_len == n_patches)
    out_dtype: output dtype (defaults to x.dtype; pass jnp.bfloat16 to halve
               the HBM writeback if downstream layers accept bf16).
    Returns: (B * C, n_patches, d_model)
    """
    B, L, C = x.shape
    d_model = weight.shape[0]
    out_dtype = jnp.dtype(x.dtype) if out_dtype is None else jnp.dtype(out_dtype)

    # --- layout plumbing in plain JAX (cheap, not worth a kernel) -------------
    xc = jnp.transpose(x, (0, 2, 1))                        # (B, C, L)
    if padding > 0:
        pad = jnp.repeat(xc[:, :, -1:], padding, axis=-1)   # replicate right edge
        xc = jnp.concatenate([xc, pad], axis=-1)            # (B, C, L + padding)
    lp = L + padding
    n_patches = (lp - patch_len) // stride + 1
    if pos_emb.shape[0] != n_patches:
        # The PyTorch module adds a (max_len, d_model) table to an
        # (n_patches, d_model) activation, so it too requires max_len == n_patches.
        raise ValueError(
            f"position-embedding max_len ({pos_emb.shape[0]}) must equal "
            f"n_patches ({n_patches})")

    if stride == patch_len:
        # Non-overlapping patches: unfold is a pure reshape (no gather).
        used = n_patches * patch_len
        patches = xc[:, :, :used].reshape(B * C, n_patches, patch_len)
    else:
        idx = (jnp.arange(n_patches)[:, None] * stride
               + jnp.arange(patch_len)[None, :])
        patches = xc[:, :, idx].reshape(B * C, n_patches, patch_len)

    G, P, K = patches.shape
    N = d_model
    R = G * P

    patches_2d = patches.reshape(R, K)        # free row-major reshape in HBM
    w_kn = weight.T                           # (K, N): lane-dense rows for the MXU

    TG = _choose_groups_per_tile(G, P, K, N, out_dtype.itemsize,
                                 target_out_tile_bytes=target_out_tile_bytes,
                                 vmem_budget_bytes=vmem_budget_bytes)
    TR = TG * P
    grid = (pl.cdiv(G, TG),)

    # Positional table pre-tiled to one row-tile; every grid step starts at a
    # multiple of P rows, so the same (TR, N) slab is valid for all steps.
    pe_tiled = jnp.tile(pos_emb.astype(jnp.float32), (TG, 1))    # (TR, N)

    out = pl.pallas_call(
        _patch_embed_kernel,
        out_shape=jax.ShapeDtypeStruct((R, N), out_dtype),
        grid_spec=pltpu.PrefetchScalarGridSpec(
            num_scalar_prefetch=0,
            grid=grid,
            in_specs=[
                # patches: tiled over the flattened row axis (pipelined)
                pl.BlockSpec((TR, K), lambda i: (i, 0)),
                # weight: constant index_map -> stays VMEM-resident
                pl.BlockSpec((K, N), lambda i: (0, 0)),
                # positional tile: constant index_map -> stays VMEM-resident
                pl.BlockSpec((TR, N), lambda i: (0, 0)),
            ],
            out_specs=pl.BlockSpec((TR, N), lambda i: (i, 0)),
        ),
        compiler_params=pltpu.CompilerParams(
            # Grid steps are independent: shard across both TCs on v7x;
            # harmless on v5e/v6e (single TC).
            dimension_semantics=("parallel",),
        ),
    )(patches_2d, w_kn, pe_tiled)

    # TODO(synk): dropout is applied as eval-mode identity; training-mode
    # random masking is not implemented.
    return out.reshape(G, P, N)


if __name__ == "__main__":
    # Small shapes consistent with the module.
    B, L, C = 2, 16, 4                      # batch, seq_len, n_vars
    patch_len, stride, padding = 8, 4, 4
    d_model = 32
    n_patches = (L + padding - patch_len) // stride + 1   # = 4 (== max_len)

    key = jax.random.PRNGKey(0)
    kx, kw, kp = jax.random.split(key, 3)

    x = jax.random.normal(kx, (B, L, C), dtype=jnp.float32)
    bound = 1.0 / (patch_len ** 0.5)        # nn.Linear default init range
    weight = jax.random.uniform(kw, (d_model, patch_len), dtype=jnp.float32,
                                minval=-bound, maxval=bound)
    pos_emb = jax.random.normal(kp, (n_patches, d_model), dtype=jnp.float32)

    y = patch_embedding(x, weight, pos_emb,
                        patch_len=patch_len, stride=stride, padding=padding)
    y = jax.block_until_ready(y)

    # --- pure-JAX reference of the PyTorch forward ----------------------------
    xc = jnp.transpose(x, (0, 2, 1))
    xp = jnp.concatenate([xc, jnp.repeat(xc[:, :, -1:], padding, axis=-1)], axis=-1)
    idx = jnp.arange(n_patches)[:, None] * stride + jnp.arange(patch_len)[None, :]
    patches_ref = xp[:, :, idx].reshape(B * C, n_patches, patch_len)
    y_ref = jnp.einsum("gpk,nk->gpn", patches_ref, weight) + pos_emb[None, :, :]

    assert y.shape == (B * C, n_patches, d_model)
    assert jnp.allclose(y, y_ref, atol=1e-5, rtol=1e-5)

    print("KERNEL_OK")
</pallas_src>

<mosaic_0001>
module attributes {stable_mosaic.version = 11 : i64} {
  func.func @_patch_embed_kernel(%arg0: i32, %arg1: memref<16x8xf32, #tpu.memory_space<vmem>>, %arg2: memref<8x32xf32, #tpu.memory_space<vmem>>, %arg3: memref<16x32xf32, #tpu.memory_space<vmem>>, %arg4: memref<16x32xf32, #tpu.memory_space<vmem>>) attributes {dimension_semantics = [#tpu.dimension_semantics<parallel>], iteration_bounds = array<i64: 2>, scalar_prefetch = 0 : i64, scratch_operands = 0 : i64, tpu.core_type = #tpu.core_type<tc>, window_params = [{transform_indices = @transform_0, window_bounds = array<i64: 16, 8>}, {pipeline_mode = #tpu.pipeline_mode<synchronous>, transform_indices = @transform_1, window_bounds = array<i64: 8, 32>}, {pipeline_mode = #tpu.pipeline_mode<synchronous>, transform_indices = @transform_2, window_bounds = array<i64: 16, 32>}, {transform_indices = @transform_3, window_bounds = array<i64: 16, 32>}]} {
    %c0 = arith.constant 0 : index
    %c0_0 = arith.constant 0 : index
    %0 = vector.load %arg1[%c0, %c0_0] : memref<16x8xf32, #tpu.memory_space<vmem>>, vector<16x8xf32>
    %c0_1 = arith.constant 0 : index
    %c0_2 = arith.constant 0 : index
    %1 = vector.load %arg2[%c0_1, %c0_2] : memref<8x32xf32, #tpu.memory_space<vmem>>, vector<8x32xf32>
    %cst = arith.constant dense<0.000000e+00> : vector<16x32xf32>
    %2 = tpu.matmul %0, %1, %cst {dimension_numbers = #tpu.dot_dimension_numbers<[1], [0], [0], [1], [0, 0, 1, 1], [], []>, precision = #tpu.contract_precision<fp32>} : vector<16x8xf32>, vector<8x32xf32>, vector<16x32xf32> -> vector<16x32xf32>
    %c0_3 = arith.constant 0 : index
    %c0_4 = arith.constant 0 : index
    %3 = vector.load %arg3[%c0_3, %c0_4] : memref<16x32xf32, #tpu.memory_space<vmem>>, vector<16x32xf32>
    %4 = arith.addf %2, %3 : vector<16x32xf32>
    %c0_5 = arith.constant 0 : index
    %c0_6 = arith.constant 0 : index
    %5 = vector.load %arg4[%c0_5, %c0_6] : memref<16x32xf32, #tpu.memory_space<vmem>>, vector<16x32xf32>
    tpu.vector_store %arg4[%c0_5, %c0_6], %4 {strides = array<i32>} : memref<16x32xf32, #tpu.memory_space<vmem>>, vector<16x32xf32>,
    return
  }
  func.func @transform_0(%arg0: i32) -> (i32, i32) {
    %c0_i32 = arith.constant 0 : i32
    %c0_i32_0 = arith.constant 0 : i32
    return %arg0, %c0_i32 : i32, i32
  }
  func.func @transform_1(%arg0: i32) -> (i32, i32) {
    %c0_i32 = arith.constant 0 : i32
    %c0_i32_0 = arith.constant 0 : i32
    %c0_i32_1 = arith.constant 0 : i32
    return %c0_i32, %c0_i32_0 : i32, i32
  }
  func.func @transform_2(%arg0: i32) -> (i32, i32) {
    %c0_i32 = arith.constant 0 : i32
    %c0_i32_0 = arith.constant 0 : i32
    %c0_i32_1 = arith.constant 0 : i32
    return %c0_i32, %c0_i32_0 : i32, i32
  }
  func.func @transform_3(%arg0: i32) -> (i32, i32) {
    %c0_i32 = arith.constant 0 : i32
    %c0_i32_0 = arith.constant 0 : i32
    return %arg0, %c0_i32 : i32, i32
  }
}

</mosaic_0001>

<llo_original>
// kernel: tpu_custom_call.1
$region0: #{tpu_custom_call.1}
  #allocation0 [shape = 'u32[]', space=smem, size = 0x4, offset = 0x4, fixed_abs, tag = 'smem constant byte address 0x4 - core index']
  #allocation1 [shape = 'u32[144,128]{1,0:T(1,128)}', space=vmem, size = 0x12000, scoped, tag = 'internal scratch']
  %s0 = inlined_call_operand.vmem [shape: f32[32,8], index: 0, kind: input, shape index: {}]
  %s1 = inlined_call_operand.vmem [shape: f32[8,32], index: 1, kind: input, shape index: {}]
  %s2 = inlined_call_operand.vmem [shape: f32[16,32], index: 2, kind: input, shape index: {}]
  %s3 = inlined_call_operand.hbm [shape: f32[32,32], index: 3, kind: output, shape index: {}]
  %s4 = sld [smem:[#allocation0]]
  $region45: #{tpu_custom_call.1} parent=0
    _
  %s6 = ssub.s32 1, %s4
  %s7 = scalar_select 0, %s6, %s4
  $region1: #{tpu_custom_call.1} parent=0
    #allocation2 [shape = 'u8[16384]{0}', space=vmem, size = 0x4000, scoped, tag = 'output window, operand 0']
    #allocation3 [shape = 's32[2]{0}', space=sflag, size = 0x8, scoped, tag = 'scoped memory for tpu_custom_call.1']
    %8 = vsyncpa [#allocation3], 0
    %s9 = scalar_lea.sflag [#allocation3], 1
    %10 = vsyncpa %s9, 0
    loop: start=0, step=1, limit=4
    $region2: #{tpu_custom_call.1} parent=1 // loop_pre_header
      _
    $region3: #{tpu_custom_call.1} parent=1 // loop_header
      %s12 = sphi 0, %s16
      %p13 = scmp.ge.s32.totalorder %s12, 4
      %s22 = sphi 0, %s24
      %s25 = sphi 0, %s22
      %s26 = sphi 0, %s25
      %s42 = sphi 0, %s26
      %s46 = sphi 0, %s46
      %s48 = sphi 0, %s46
      %s49 = sphi 0, %s48
      %s63 = sphi 0, %s49
      %s67 = sphi 0, %s67
      %s69 = sphi 0, %s67
      %s70 = sphi 0, %s69
      %s84 = sphi 0, %s70
      %s90 = sphi 0, %s92
      %s93 = sphi 0, %s90
      %s94 = sphi 0, %s93
      %s110 = sphi 0, %s94
    $region4: #{tpu_custom_call.1} parent=1 // loop_header_branch
      %15 = sbr.rel (%p13) target = $region8
    $region5: #{tpu_custom_call.1} parent=1 // loop_body
      %s17 = ssub.s32 %s12, 1
      %s18 = ssub.s32 %s12, 2
      %s19 = sadd.s32 %s12, 1
      %s20 = ssub.s32 %s12, %s19
      %p21 = scmp.eq.s32.totalorder %s20, 0
      %s23 = sadd.s32 %s22, 1
      %s24 = scalar_select %p21, %s22, %s23
      %p27 = pneg %p21
      %p28 = scmp.eq.s32.totalorder %s12, 1
      %p29 = por %p27, %p28
      %p30 = scmp.ne.s32.totalorder %s22, %s25
      %p31 = scmp.eq.s32.totalorder %s12, 0
      %p32 = por %p30, %p31
      %p33 = scmp.ne.s32.totalorder %s22, %s25
      %p34 = scmp.eq.s32.totalorder %s17, 1
      %p35 = por %p33, %p34
      %p36 = scmp.ne.s32.totalorder %s25, %s26
      %p37 = scmp.eq.s32.totalorder %s17, 0
      %p38 = por %p36, %p37
      %p39 = scmp.ne.s32.totalorder %s25, %s26
      %p40 = scmp.eq.s32.totalorder %s18, 1
      %p41 = por %p39, %p40
      %p43 = scmp.ne.s32.totalorder %s26, %s42
      %p44 = scmp.eq.s32.totalorder %s18, 0
      %p45 = por %p43, %p44
      %s47 = sadd.s32 %s46, 1
      %p50 = scmp.eq.s32.totalorder %s12, 1
      %p51 = scmp.ne.s32.totalorder %s46, %s48
      %p52 = scmp.eq.s32.totalorder %s12, 0
      %p53 = por %p51, %p52
      %p54 = scmp.ne.s32.totalorder %s46, %s48
      %p55 = scmp.eq.s32.totalorder %s17, 1
      %p56 = por %p54, %p55
      %p57 = scmp.ne.s32.totalorder %s48, %s49
      %p58 = scmp.eq.s32.totalorder %s17, 0
      %p59 = por %p57, %p58
      %p60 = scmp.ne.s32.totalorder %s48, %s49
      %p61 = scmp.eq.s32.totalorder %s18, 1
      %p62 = por %p60, %p61
      %p64 = scmp.ne.s32.totalorder %s49, %s63
      %p65 = scmp.eq.s32.totalorder %s18, 0
      %p66 = por %p64, %p65
      %s68 = sadd.s32 %s67, 1
      %p71 = scmp.eq.s32.totalorder %s12, 1
      %p72 = scmp.ne.s32.totalorder %s67, %s69
      %p73 = scmp.eq.s32.totalorder %s12, 0
      %p74 = por %p72, %p73
      %p75 = scmp.ne.s32.totalorder %s67, %s69
      %p76 = scmp.eq.s32.totalorder %s17, 1
      %p77 = por %p75, %p76
      %p78 = scmp.ne.s32.totalorder %s69, %s70
      %p79 = scmp.eq.s32.totalorder %s17, 0
      %p80 = por %p78, %p79
      %p81 = scmp.ne.s32.totalorder %s69, %s70
      %p82 = scmp.eq.s32.totalorder %s18, 1
      %p83 = por %p81, %p82
      %p85 = scmp.ne.s32.totalorder %s70, %s84
      %p86 = scmp.eq.s32.totalorder %s18, 0
      %p87 = por %p85, %p86
      %s88 = ssub.s32 %s12, %s19
      %p89 = scmp.eq.s32.totalorder %s88, 0
      %s91 = sadd.s32 %s90, 1
      %s92 = scalar_select %p89, %s90, %s91
      %p95 = pneg %p89
      %p96 = scmp.eq.s32.totalorder %s12, 1
      %p97 = por %p95, %p96
      %p98 = scmp.ne.s32.totalorder %s90, %s93
      %p99 = scmp.eq.s32.totalorder %s12, 0
      %p100 = por %p98, %p99
      %p101 = scmp.ne.s32.totalorder %s90, %s93
      %p102 = scmp.eq.s32.totalorder %s17, 1
      %p103 = por %p101, %p102
      %p104 = scmp.ne.s32.totalorder %s93, %s94
      %p105 = scmp.eq.s32.totalorder %s17, 0
      %p106 = por %p104, %p105
      %p107 = scmp.ne.s32.totalorder %s93, %s94
      %p108 = scmp.eq.s32.totalorder %s18, 1
      %p109 = por %p107, %p108
      %p111 = scmp.ne.s32.totalorder %s94, %s110
      %p112 = scmp.eq.s32.totalorder %s18, 0
      %p113 = por %p111, %p112
      %p114 = scmp.le.s32.totalorder 1, %s12
      %p115 = scmp.lt.s32.totalorder %s12, 3
      %p116 = pnand %p114, %p115
      %p117 = pneg %p116
      // Predicated region
      $region9: #{tpu_custom_call.1} parent=5 // pred_check
        _
      $region10: #{tpu_custom_call.1} parent=5 // pred_check_branch
        %119 = sbr.rel (%p116) target = $region12
      $region11: #{tpu_custom_call.1} parent=5 // pred_region
        %s120 = ssub.s32 %s12, 1
        // Predicated region
        $region13: #{tpu_custom_call.1} parent=11 // pred_check
          %p121 = pneg %p59
        $region14: #{tpu_custom_call.1} parent=11 // pred_check_branch
          %123 = sbr.rel (%p121) target = $region16
        $region15: #{tpu_custom_call.1} parent=11 // pred_region
          _
        $region16: #{tpu_custom_call.1} parent=11 // pred_fallthru
          _
        // Predicated region
        $region17: #{tpu_custom_call.1} parent=11 // pred_check
          %p124 = pneg %p80
        $region18: #{tpu_custom_call.1} parent=11 // pred_check_branch
          %126 = sbr.rel (%p124) target = $region20
        $region19: #{tpu_custom_call.1} parent=11 // pred_region
          _
        $region20: #{tpu_custom_call.1} parent=11 // pred_fallthru
          _
      $region12: #{tpu_custom_call.1} parent=5 // pred_fallthru
        _
      %p127 = scmp.lt.s32.totalorder %s12, 2
      // Predicated region
      $region21: #{tpu_custom_call.1} parent=5 // pred_check
        %p128 = pneg %p127
      $region22: #{tpu_custom_call.1} parent=5 // pred_check_branch
        %130 = sbr.rel (%p128) target = $region24
      $region23: #{tpu_custom_call.1} parent=5 // pred_region
        // Predicated region
        $region25: #{tpu_custom_call.1} parent=23 // pred_check
          %p131 = pneg %p32
        $region26: #{tpu_custom_call.1} parent=23 // pred_check_branch
          %133 = sbr.rel (%p131) target = $region28
        $region27: #{tpu_custom_call.1} parent=23 // pred_region
          %s134 = smul.u32 2, %s12
          %p135 = scmp.lt.s32.totalorder %s134, 3
          %s136 = scalar_select %p135, %s134, 3
          %s137 = smul.addr %s136, 8
          %s138 = scalar_lea.vmem %s0, %s137
          %s139 = smul.u32 2, %s12
        $region28: #{tpu_custom_call.1} parent=23 // pred_fallthru
          _
      $region24: #{tpu_custom_call.1} parent=5 // pred_fallthru
        _
      %p140 = scmp.le.s32.totalorder 1, %s12
      %p141 = scmp.lt.s32.totalorder %s12, 3
      %p142 = pnand %p140, %p141
      %p143 = pneg %p142
      // Predicated region
      $region29: #{tpu_custom_call.1} parent=5 // pred_check
        _
      $region30: #{tpu_custom_call.1} parent=5 // pred_check_branch
        %145 = sbr.rel (%p142) target = $region32
      $region31: #{tpu_custom_call.1} parent=5 // pred_region
        %s146 = ssub.s32 %s12, 1
        %s147 = smul.u32 2, %s17
        %p148 = scmp.lt.s32.totalorder %s147, 3
        %s149 = scalar_select %p148, %s147, 3
        %s150 = smul.addr %s149, 8
        %s151 = scalar_lea.vmem %s0, %s150
        %p152 = pneg %p38
        %p153 = pneg %p35
        %p154 = pneg %p59
        %p155 = pneg %p56
        %p156 = pneg %p80
        %p157 = pneg %p77
        %p158 = pneg %p106
        %p159 = pneg %p103
        %s160 = sand.u32 %s93, 1
        %s161 = scalar_lea.sflag [#allocation3], %s160
        %s162 = sand.u32 %s93, 1
        %s163 = smul.addr %s162, 16
        %s164 = scalar_lea.vmem [#allocation2], %s163
        %s165 = smul.u32 2, %s17
        %p166 = scmp.lt.s32.totalorder %s165, 3
        %s167 = scalar_select %p166, %s165, 3
        %s168 = smul.addr %s167, 8
        %s169 = scalar_lea.vmem %s0, %s168
        %s170 = smul.u32 2, %s17
        %s171 = smul.u32 2, %s17
        %v172 = vld [vmem:[%s169] sm:$0xff]
        %v173 = vld [vmem:[%s169 + $0x8] sm:$0xff]
        %v174 = vld [vmem:[%s1] sm:$0xff]
        %v175 = vld [vmem:[%s2] sm:$0xff]
        %v176 = vld [vmem:[%s2 + $0x8] sm:$0xff]
        %vm177 = vcmask 64512
        %v179 = vsel %vm177, %v172, 0
        %v182 = vsel %vm177, %v173, 0
        %184 = vmatprep.subr.mxu0 0.0
        %185 = vmatpush1.msra.mxu0 0.0
        %186 = vmatprep.subr.mxu0 0.0
        %187 = vmatpush1.msra.mxu0 0.0
        %188 = vmatprep.subr.mxu0 0.0
        %189 = vmatpush1.msra.mxu0 0.0
        %190 = vmatprep.subr.mxu0 0.0
        %191 = vmatpush1.msra.mxu0 0.0
        %192 = vmatprep.subr.mxu0 0.0
        %193 = vmatpush1.msra.mxu0 0.0
        %194 = vmatprep.subr.mxu0 0.0
        %195 = vmatpush1.msra.mxu0 0.0
        %196 = vmatprep.subr.mxu0 0.0
        %197 = vmatpush1.msra.mxu0 0.0
        %198 = vmatprep.subr.mxu0 0.0
        %199 = vmatpush1.msra.mxu0 0.0
        %200 = vmatprep.subr.mxu0 0.0
        %201 = vmatpush1.msra.mxu0 0.0
        %202 = vmatprep.subr.mxu0 0.0
        %203 = vmatpush1.msra.mxu0 0.0
        %204 = vmatprep.subr.mxu0 0.0
        %205 = vmatpush1.msra.mxu0 0.0
        %206 = vmatprep.subr.mxu0 0.0
        %207 = vmatpush1.msra.mxu0 0.0
        %208 = vmatprep.subr.mxu0 0.0
        %209 = vmatpush1.msra.mxu0 0.0
        %210 = vmatprep.subr.mxu0 0.0
        %211 = vmatpush1.msra.mxu0 0.0
        %212 = vmatprep.subr.mxu0 0.0
        %213 = vmatpush1.msra.mxu0 0.0
        %214 = vmatprep.subr.mxu0 0.0
        %v215 = vand.u32 %v174, 4294901760
        %216 = vmatpush1.msra.mxu0 %v215
        %217 = vmatprep.subr.mxu0 0.0
        %218 = vmatpush2.msra.mxu0 0.0
        %219 = vmatprep.subr.mxu0 0.0
        %220 = vmatpush2.msra.mxu0 0.0
        %221 = vmatprep.subr.mxu0 0.0
        %222 = vmatpush2.msra.mxu0 0.0
        %223 = vmatprep.subr.mxu0 0.0
        %224 = vmatpush2.msra.mxu0 0.0
        %225 = vmatprep.subr.mxu0 0.0
        %226 = vmatpush2.msra.mxu0 0.0
        %227 = vmatprep.subr.mxu0 0.0
        %228 = vmatpush2.msra.mxu0 0.0
        %229 = vmatprep.subr.mxu0 0.0
        %230 = vmatpush2.msra.mxu0 0.0
        %231 = vmatprep.subr.mxu0 0.0
        %232 = vmatpush2.msra.mxu0 0.0
        %233 = vmatprep.subr.mxu0 0.0
        %234 = vmatpush2.msra.mxu0 0.0
        %235 = vmatprep.subr.mxu0 0.0
        %236 = vmatpush2.msra.mxu0 0.0
        %237 = vmatprep.subr.mxu0 0.0
        %238 = vmatpush2.msra.mxu0 0.0
        %239 = vmatprep.subr.mxu0 0.0
        %240 = vmatpush2.msra.mxu0 0.0
        %241 = vmatprep.subr.mxu0 0.0
        %242 = vmatpush2.msra.mxu0 0.0
        %243 = vmatprep.subr.mxu0 0.0
        %244 = vmatpush2.msra.mxu0 0.0
        %245 = vmatprep.subr.mxu0 0.0
        %246 = vmatpush2.msra.mxu0 0.0
        %247 = vmatprep.subr.mxu0 0.0
        %248 = vmatpush2.msra.mxu0 0.0
        %249 = vmatprep.mubr.f32.mxu0 0.0
        %v250 = vand.u32 %v179, 4294901760
        %v251 = vsub.f32 %v179, %v250
        %v252 = vand.u32 %v251, 4294901760
        %v253 = vsub.f32 %v251, %v252
        %v254 = vand.u32 %v253, 4294901760
        %255 = vmatmul.mubr.f32.gmra.mxu0 %v254
        %v256 = vpop.f32.mrf.mxu0
        %v257 = vadd.f32 %v175, %v256
        %v258 = vpop.f32.mrf.mxu0
        %259 = vmatprep.mubr.f32.mxu0 0.0
        %v260 = vand.u32 %v182, 4294901760
        %v261 = vsub.f32 %v182, %v260
        %v262 = vand.u32 %v261, 4294901760
        %v263 = vsub.f32 %v261, %v262
        %v264 = vand.u32 %v263, 4294901760
        %265 = vmatmul.mubr.f32.gmra.mxu0 %v264
        %v266 = vpop.f32.mrf.mxu0
        %v267 = vadd.f32 %v176, %v266
        %v268 = vpop.f32.mrf.mxu0
        %269 = vdwg.mxu0
        %270 = vmatprep.subr.mxu0 0.0
        %271 = vmatpush1.msra.mxu0 0.0
        %272 = vmatprep.subr.mxu0 0.0
        %273 = vmatpush1.msra.mxu0 0.0
        %274 = vmatprep.subr.mxu0 0.0
        %275 = vmatpush1.msra.mxu0 0.0
        %276 = vmatprep.subr.mxu0 0.0
        %277 = vmatpush1.msra.mxu0 0.0
        %278 = vmatprep.subr.mxu0 0.0
        %279 = vmatpush1.msra.mxu0 0.0
        %280 = vmatprep.subr.mxu0 0.0
        %281 = vmatpush1.msra.mxu0 0.0
        %282 = vmatprep.subr.mxu0 0.0
        %283 = vmatpush1.msra.mxu0 0.0
        %284 = vmatprep.subr.mxu0 0.0
        %285 = vmatpush1.msra.mxu0 0.0
        %286 = vmatprep.subr.mxu0 0.0
        %287 = vmatpush1.msra.mxu0 0.0
        %288 = vmatprep.subr.mxu0 0.0
        %289 = vmatpush1.msra.mxu0 0.0
        %290 = vmatprep.subr.mxu0 0.0
        %291 = vmatpush1.msra.mxu0 0.0
        %292 = vmatprep.subr.mxu0 0.0
        %293 = vmatpush1.msra.mxu0 0.0
        %294 = vmatprep.subr.mxu0 0.0
        %295 = vmatpush1.msra.mxu0 0.0
        %296 = vmatprep.subr.mxu0 0.0
        %297 = vmatpush1.msra.mxu0 0.0
        %298 = vmatprep.subr.mxu0 0.0
        %299 = vmatpush1.msra.mxu0 0.0
        %300 = vmatprep.subr.mxu0 0.0
        %v301 = vand.u32 %v174, 4294901760
        %v302 = vsub.f32 %v174, %v301
        %v303 = vand.u32 %v302, 4294901760
        %v304 = vsub.f32 %v302, %v303
        %v305 = vand.u32 %v304, 4294901760
        %306 = vmatpush1.msra.mxu0 %v305
        %307 = vmatprep.subr.mxu0 0.0
        %308 = vmatpush2.msra.mxu0 0.0
        %309 = vmatprep.subr.mxu0 0.0
        %310 = vmatpush2.msra.mxu0 0.0
        %311 = vmatprep.subr.mxu0 0.0
        %312 = vmatpush2.msra.mxu0 0.0
        %313 = vmatprep.subr.mxu0 0.0
        %314 = vmatpush2.msra.mxu0 0.0
        %315 = vmatprep.subr.mxu0 0.0
        %316 = vmatpush2.msra.mxu0 0.0
        %317 = vmatprep.subr.mxu0 0.0
        %318 = vmatpush2.msra.mxu0 0.0
        %319 = vmatprep.subr.mxu0 0.0
        %320 = vmatpush2.msra.mxu0 0.0
        %321 = vmatprep.subr.mxu0 0.0
        %322 = vmatpush2.msra.mxu0 0.0
        %323 = vmatprep.subr.mxu0 0.0
        %324 = vmatpush2.msra.mxu0 0.0
        %325 = vmatprep.subr.mxu0 0.0
        %326 = vmatpush2.msra.mxu0 0.0
        %327 = vmatprep.subr.mxu0 0.0
        %328 = vmatpush2.msra.mxu0 0.0
        %329 = vmatprep.subr.mxu0 0.0
        %330 = vmatpush2.msra.mxu0 0.0
        %331 = vmatprep.subr.mxu0 0.0
        %332 = vmatpush2.msra.mxu0 0.0
        %333 = vmatprep.subr.mxu0 0.0
        %334 = vmatpush2.msra.mxu0 0.0
        %335 = vmatprep.subr.mxu0 0.0
        %336 = vmatpush2.msra.mxu0 0.0
        %337 = vmatprep.subr.mxu0 0.0
        %338 = vmatpush2.msra.mxu0 0.0
        %339 = vmatprep.mubr.f32.mxu0 0.0
        %v340 = vand.u32 %v179, 4294901760
        %341 = vmatmul.mubr.f32.gmra.mxu0 %v340
        %v342 = vpop.f32.mrf.mxu0
        %v343 = vadd.f32 %v257, %v342
        %v344 = vpop.f32.mrf.mxu0
        %345 = vmatprep.mubr.f32.mxu0 0.0
        %v346 = vand.u32 %v182, 4294901760
        %347 = vmatmul.mubr.f32.gmra.mxu0 %v346
        %v348 = vpop.f32.mrf.mxu0
        %v349 = vadd.f32 %v267, %v348
        %v350 = vpop.f32.mrf.mxu0
        %351 = vdwg.mxu0
        %352 = vmatprep.subr.mxu0 0.0
        %353 = vmatpush1.msra.mxu0 0.0
        %354 = vmatprep.subr.mxu0 0.0
        %355 = vmatpush1.msra.mxu0 0.0
        %356 = vmatprep.subr.mxu0 0.0
        %357 = vmatpush1.msra.mxu0 0.0
        %358 = vmatprep.subr.mxu0 0.0
        %359 = vmatpush1.msra.mxu0 0.0
        %360 = vmatprep.subr.mxu0 0.0
        %361 = vmatpush1.msra.mxu0 0.0
        %362 = vmatprep.subr.mxu0 0.0
        %363 = vmatpush1.msra.mxu0 0.0
        %364 = vmatprep.subr.mxu0 0.0
        %365 = vmatpush1.msra.mxu0 0.0
        %366 = vmatprep.subr.mxu0 0.0
        %367 = vmatpush1.msra.mxu0 0.0
        %368 = vmatprep.subr.mxu0 0.0
        %369 = vmatpush1.msra.mxu0 0.0
        %370 = vmatprep.subr.mxu0 0.0
        %371 = vmatpush1.msra.mxu0 0.0
        %372 = vmatprep.subr.mxu0 0.0
        %373 = vmatpush1.msra.mxu0 0.0
        %374 = vmatprep.subr.mxu0 0.0
        %375 = vmatpush1.msra.mxu0 0.0
        %376 = vmatprep.subr.mxu0 0.0
        %377 = vmatpush1.msra.mxu0 0.0
        %378 = vmatprep.subr.mxu0 0.0
        %379 = vmatpush1.msra.mxu0 0.0
        %380 = vmatprep.subr.mxu0 0.0
        %381 = vmatpush1.msra.mxu0 0.0
        %382 = vmatprep.subr.mxu0 0.0
        %v383 = vand.u32 %v174, 4294901760
        %v384 = vsub.f32 %v174, %v383
        %385 = vmatpush1.msra.mxu0 %v384
        %386 = vmatprep.subr.mxu0 0.0
        %387 = vmatpush2.msra.mxu0 0.0
        %388 = vmatprep.subr.mxu0 0.0
        %389 = vmatpush2.msra.mxu0 0.0
        %390 = vmatprep.subr.mxu0 0.0
        %391 = vmatpush2.msra.mxu0 0.0
        %392 = vmatprep.subr.mxu0 0.0
        %393 = vmatpush2.msra.mxu0 0.0
        %394 = vmatprep.subr.mxu0 0.0
        %395 = vmatpush2.msra.mxu0 0.0
        %396 = vmatprep.subr.mxu0 0.0
        %397 = vmatpush2.msra.mxu0 0.0
        %398 = vmatprep.subr.mxu0 0.0
        %399 = vmatpush2.msra.mxu0 0.0
        %400 = vmatprep.subr.mxu0 0.0
        %401 = vmatpush2.msra.mxu0 0.0
        %402 = vmatprep.subr.mxu0 0.0
        %403 = vmatpush2.msra.mxu0 0.0
        %404 = vmatprep.subr.mxu0 0.0
        %405 = vmatpush2.msra.mxu0 0.0
        %406 = vmatprep.subr.mxu0 0.0
        %407 = vmatpush2.msra.mxu0 0.0
        %408 = vmatprep.subr.mxu0 0.0
        %409 = vmatpush2.msra.mxu0 0.0
        %410 = vmatprep.subr.mxu0 0.0
        %411 = vmatpush2.msra.mxu0 0.0
        %412 = vmatprep.subr.mxu0 0.0
        %413 = vmatpush2.msra.mxu0 0.0
        %414 = vmatprep.subr.mxu0 0.0
        %415 = vmatpush2.msra.mxu0 0.0
        %416 = vmatprep.subr.mxu0 0.0
        %417 = vmatpush2.msra.mxu0 0.0
        %418 = vmatprep.mubr.f32.mxu0 0.0
        %v419 = vand.u32 %v179, 4294901760
        %v420 = vsub.f32 %v179, %v419
        %421 = vmatmul.mubr.f32.gmra.mxu0 %v420
        %v422 = vpop.f32.mrf.mxu0
        %v423 = vadd.f32 %v343, %v422
        %v424 = vpop.f32.mrf.mxu0
        %425 = vmatprep.mubr.f32.mxu0 0.0
        %v426 = vand.u32 %v182, 4294901760
        %v427 = vsub.f32 %v182, %v426
        %428 = vmatmul.mubr.f32.gmra.mxu0 %v427
        %v429 = vpop.f32.mrf.mxu0
        %v430 = vadd.f32 %v349, %v429
        %v431 = vpop.f32.mrf.mxu0
        %432 = vdwg.mxu0
        %433 = vmatprep.subr.mxu0 0.0
        %434 = vmatpush1.msra.mxu0 0.0
        %435 = vmatprep.subr.mxu0 0.0
        %436 = vmatpush1.msra.mxu0 0.0
        %437 = vmatprep.subr.mxu0 0.0
        %438 = vmatpush1.msra.mxu0 0.0
        %439 = vmatprep.subr.mxu0 0.0
        %440 = vmatpush1.msra.mxu0 0.0
        %441 = vmatprep.subr.mxu0 0.0
        %442 = vmatpush1.msra.mxu0 0.0
        %443 = vmatprep.subr.mxu0 0.0
        %444 = vmatpush1.msra.mxu0 0.0
        %445 = vmatprep.subr.mxu0 0.0
        %446 = vmatpush1.msra.mxu0 0.0
        %447 = vmatprep.subr.mxu0 0.0
        %448 = vmatpush1.msra.mxu0 0.0
        %449 = vmatprep.subr.mxu0 0.0
        %450 = vmatpush1.msra.mxu0 0.0
        %451 = vmatprep.subr.mxu0 0.0
        %452 = vmatpush1.msra.mxu0 0.0
        %453 = vmatprep.subr.mxu0 0.0
        %454 = vmatpush1.msra.mxu0 0.0
        %455 = vmatprep.subr.mxu0 0.0
        %456 = vmatpush1.msra.mxu0 0.0
        %457 = vmatprep.subr.mxu0 0.0
        %458 = vmatpush1.msra.mxu0 0.0
        %459 = vmatprep.subr.mxu0 0.0
        %460 = vmatpush1.msra.mxu0 0.0
        %461 = vmatprep.subr.mxu0 0.0
        %462 = vmatpush1.msra.mxu0 0.0
        %463 = vmatprep.subr.mxu0 0.0
        %v464 = vand.u32 %v174, 4294901760
        %465 = vmatpush1.msra.mxu0 %v464
        %466 = vmatprep.subr.mxu0 0.0
        %467 = vmatpush2.msra.mxu0 0.0
        %468 = vmatprep.subr.mxu0 0.0
        %469 = vmatpush2.msra.mxu0 0.0
        %470 = vmatprep.subr.mxu0 0.0
        %471 = vmatpush2.msra.mxu0 0.0
        %472 = vmatprep.subr.mxu0 0.0
        %473 = vmatpush2.msra.mxu0 0.0
        %474 = vmatprep.subr.mxu0 0.0
        %475 = vmatpush2.msra.mxu0 0.0
        %476 = vmatprep.subr.mxu0 0.0
        %477 = vmatpush2.msra.mxu0 0.0
        %478 = vmatprep.subr.mxu0 0.0
        %479 = vmatpush2.msra.mxu0 0.0
        %480 = vmatprep.subr.mxu0 0.0
        %481 = vmatpush2.msra.mxu0 0.0
        %482 = vmatprep.subr.mxu0 0.0
        %483 = vmatpush2.msra.mxu0 0.0
        %484 = vmatprep.subr.mxu0 0.0
        %485 = vmatpush2.msra.mxu0 0.0
        %486 = vmatprep.subr.mxu0 0.0
        %487 = vmatpush2.msra.mxu0 0.0
        %488 = vmatprep.subr.mxu0 0.0
        %489 = vmatpush2.msra.mxu0 0.0
        %490 = vmatprep.subr.mxu0 0.0
        %491 = vmatpush2.msra.mxu0 0.0
        %492 = vmatprep.subr.mxu0 0.0
        %493 = vmatpush2.msra.mxu0 0.0
        %494 = vmatprep.subr.mxu0 0.0
        %495 = vmatpush2.msra.mxu0 0.0
        %496 = vmatprep.subr.mxu0 0.0
        %497 = vmatpush2.msra.mxu0 0.0
        %498 = vmatprep.mubr.f32.mxu0 0.0
        %v499 = vand.u32 %v179, 4294901760
        %v500 = vsub.f32 %v179, %v499
        %v501 = vand.u32 %v500, 4294901760
        %502 = vmatmul.mubr.f32.gmra.mxu0 %v501
        %v503 = vpop.f32.mrf.mxu0
        %v504 = vadd.f32 %v423, %v503
        %v505 = vpop.f32.mrf.mxu0
        %506 = vmatprep.mubr.f32.mxu0 0.0
        %v507 = vand.u32 %v182, 4294901760
        %v508 = vsub.f32 %v182, %v507
        %v509 = vand.u32 %v508, 4294901760
        %510 = vmatmul.mubr.f32.gmra.mxu0 %v509
        %v511 = vpop.f32.mrf.mxu0
        %v512 = vadd.f32 %v430, %v511
        %v513 = vpop.f32.mrf.mxu0
        %514 = vdwg.mxu0
        %515 = vmatprep.subr.mxu0 0.0
        %516 = vmatpush1.msra.mxu0 0.0
        %517 = vmatprep.subr.mxu0 0.0
        %518 = vmatpush1.msra.mxu0 0.0
        %519 = vmatprep.subr.mxu0 0.0
        %520 = vmatpush1.msra.mxu0 0.0
        %521 = vmatprep.subr.mxu0 0.0
        %522 = vmatpush1.msra.mxu0 0.0
        %523 = vmatprep.subr.mxu0 0.0
        %524 = vmatpush1.msra.mxu0 0.0
        %525 = vmatprep.subr.mxu0 0.0
        %526 = vmatpush1.msra.mxu0 0.0
        %527 = vmatprep.subr.mxu0 0.0
        %528 = vmatpush1.msra.mxu0 0.0
        %529 = vmatprep.subr.mxu0 0.0
        %530 = vmatpush1.msra.mxu0 0.0
        %531 = vmatprep.subr.mxu0 0.0
        %532 = vmatpush1.msra.mxu0 0.0
        %533 = vmatprep.subr.mxu0 0.0
        %534 = vmatpush1.msra.mxu0 0.0
        %535 = vmatprep.subr.mxu0 0.0
        %536 = vmatpush1.msra.mxu0 0.0
        %537 = vmatprep.subr.mxu0 0.0
        %538 = vmatpush1.msra.mxu0 0.0
        %539 = vmatprep.subr.mxu0 0.0
        %540 = vmatpush1.msra.mxu0 0.0
        %541 = vmatprep.subr.mxu0 0.0
        %542 = vmatpush1.msra.mxu0 0.0
        %543 = vmatprep.subr.mxu0 0.0
        %544 = vmatpush1.msra.mxu0 0.0
        %545 = vmatprep.subr.mxu0 0.0
        %v546 = vand.u32 %v174, 4294901760
        %v547 = vsub.f32 %v174, %v546
        %v548 = vand.u32 %v547, 4294901760
        %549 = vmatpush1.msra.mxu0 %v548
        %550 = vmatprep.subr.mxu0 0.0
        %551 = vmatpush2.msra.mxu0 0.0
        %552 = vmatprep.subr.mxu0 0.0
        %553 = vmatpush2.msra.mxu0 0.0
        %554 = vmatprep.subr.mxu0 0.0
        %555 = vmatpush2.msra.mxu0 0.0
        %556 = vmatprep.subr.mxu0 0.0
        %557 = vmatpush2.msra.mxu0 0.0
        %558 = vmatprep.subr.mxu0 0.0
        %559 = vmatpush2.msra.mxu0 0.0
        %560 = vmatprep.subr.mxu0 0.0
        %561 = vmatpush2.msra.mxu0 0.0
        %562 = vmatprep.subr.mxu0 0.0
        %563 = vmatpush2.msra.mxu0 0.0
        %564 = vmatprep.subr.mxu0 0.0
        %565 = vmatpush2.msra.mxu0 0.0
        %566 = vmatprep.subr.mxu0 0.0
        %567 = vmatpush2.msra.mxu0 0.0
        %568 = vmatprep.subr.mxu0 0.0
        %569 = vmatpush2.msra.mxu0 0.0
        %570 = vmatprep.subr.mxu0 0.0
        %571 = vmatpush2.msra.mxu0 0.0
        %572 = vmatprep.subr.mxu0 0.0
        %573 = vmatpush2.msra.mxu0 0.0
        %574 = vmatprep.subr.mxu0 0.0
        %575 = vmatpush2.msra.mxu0 0.0
        %576 = vmatprep.subr.mxu0 0.0
        %577 = vmatpush2.msra.mxu0 0.0
        %578 = vmatprep.subr.mxu0 0.0
        %579 = vmatpush2.msra.mxu0 0.0
        %580 = vmatprep.subr.mxu0 0.0
        %581 = vmatpush2.msra.mxu0 0.0
        %582 = vmatprep.mubr.f32.mxu0 0.0
        %v583 = vand.u32 %v179, 4294901760
        %584 = vmatmul.mubr.f32.gmra.mxu0 %v583
        %v585 = vpop.f32.mrf.mxu0
        %v586 = vadd.f32 %v504, %v585
        %v587 = vpop.f32.mrf.mxu0
        %588 = vmatprep.mubr.f32.mxu0 0.0
        %v589 = vand.u32 %v182, 4294901760
        %590 = vmatmul.mubr.f32.gmra.mxu0 %v589
        %v591 = vpop.f32.mrf.mxu0
        %v592 = vadd.f32 %v512, %v591
        %v593 = vpop.f32.mrf.mxu0
        %594 = vdwg.mxu0
        %595 = vmatprep.subr.mxu0 0.0
        %596 = vmatpush1.msra.mxu0 0.0
        %597 = vmatprep.subr.mxu0 0.0
        %598 = vmatpush1.msra.mxu0 0.0
        %599 = vmatprep.subr.mxu0 0.0
        %600 = vmatpush1.msra.mxu0 0.0
        %601 = vmatprep.subr.mxu0 0.0
        %602 = vmatpush1.msra.mxu0 0.0
        %603 = vmatprep.subr.mxu0 0.0
        %604 = vmatpush1.msra.mxu0 0.0
        %605 = vmatprep.subr.mxu0 0.0
        %606 = vmatpush1.msra.mxu0 0.0
        %607 = vmatprep.subr.mxu0 0.0
        %608 = vmatpush1.msra.mxu0 0.0
        %609 = vmatprep.subr.mxu0 0.0
        %610 = vmatpush1.msra.mxu0 0.0
        %611 = vmatprep.subr.mxu0 0.0
        %612 = vmatpush1.msra.mxu0 0.0
        %613 = vmatprep.subr.mxu0 0.0
        %614 = vmatpush1.msra.mxu0 0.0
        %615 = vmatprep.subr.mxu0 0.0
        %616 = vmatpush1.msra.mxu0 0.0
        %617 = vmatprep.subr.mxu0 0.0
        %618 = vmatpush1.msra.mxu0 0.0
        %619 = vmatprep.subr.mxu0 0.0
        %620 = vmatpush1.msra.mxu0 0.0
        %621 = vmatprep.subr.mxu0 0.0
        %622 = vmatpush1.msra.mxu0 0.0
        %623 = vmatprep.subr.mxu0 0.0
        %624 = vmatpush1.msra.mxu0 0.0
        %625 = vmatprep.subr.mxu0 0.0
        %v626 = vand.u32 %v174, 4294901760
        %627 = vmatpush1.msra.mxu0 %v626
        %628 = vmatprep.subr.mxu0 0.0
        %629 = vmatpush2.msra.mxu0 0.0
        %630 = vmatprep.subr.mxu0 0.0
        %631 = vmatpush2.msra.mxu0 0.0
        %632 = vmatprep.subr.mxu0 0.0
        %633 = vmatpush2.msra.mxu0 0.0
        %634 = vmatprep.subr.mxu0 0.0
        %635 = vmatpush2.msra.mxu0 0.0
        %636 = vmatprep.subr.mxu0 0.0
        %637 = vmatpush2.msra.mxu0 0.0
        %638 = vmatprep.subr.mxu0 0.0
        %639 = vmatpush2.msra.mxu0 0.0
        %640 = vmatprep.subr.mxu0 0.0
        %641 = vmatpush2.msra.mxu0 0.0
        %642 = vmatprep.subr.mxu0 0.0
        %643 = vmatpush2.msra.mxu0 0.0
        %644 = vmatprep.subr.mxu0 0.0
        %645 = vmatpush2.msra.mxu0 0.0
        %646 = vmatprep.subr.mxu0 0.0
        %647 = vmatpush2.msra.mxu0 0.0
        %648 = vmatprep.subr.mxu0 0.0
        %649 = vmatpush2.msra.mxu0 0.0
        %650 = vmatprep.subr.mxu0 0.0
        %651 = vmatpush2.msra.mxu0 0.0
        %652 = vmatprep.subr.mxu0 0.0
        %653 = vmatpush2.msra.mxu0 0.0
        %654 = vmatprep.subr.mxu0 0.0
        %655 = vmatpush2.msra.mxu0 0.0
        %656 = vmatprep.subr.mxu0 0.0
        %657 = vmatpush2.msra.mxu0 0.0
        %658 = vmatprep.subr.mxu0 0.0
        %659 = vmatpush2.msra.mxu0 0.0
        %660 = vmatprep.mubr.f32.mxu0 0.0
        %v661 = vand.u32 %v179, 4294901760
        %662 = vmatmul.mubr.f32.gmra.mxu0 %v661
        %v663 = vpop.f32.mrf.mxu0
        %v664 = vadd.f32 %v586, %v663
        %v665 = vpop.f32.mrf.mxu0
        %666 = vmatprep.mubr.f32.mxu0 0.0
        %v667 = vand.u32 %v182, 4294901760
        %668 = vmatmul.mubr.f32.gmra.mxu0 %v667
        %v669 = vpop.f32.mrf.mxu0
        %v670 = vadd.f32 %v592, %v669
        %v671 = vpop.f32.mrf.mxu0
        %672 = vdwg.mxu0
        %vm673 = vcmask 261120
        %674 = vst.msk [vmem:[%s164] sm:$0xff] %vm673, %v664
        %675 = vst.msk [vmem:[%s164 + $0x8] sm:$0xff] %vm673, %v670
        %s676 = sand.u32 %s93, 1
        %s677 = scalar_lea.sflag [#allocation3], %s676
        %s678 = sand.u32 %s93, 1
        %s679 = smul.addr %s678, 16
        %s680 = scalar_lea.vmem [#allocation2], %s679
        // Predicated region
        $region33: #{tpu_custom_call.1} parent=31 // pred_check
          %p681 = pneg %p103
        $region34: #{tpu_custom_call.1} parent=31 // pred_check_branch
          %683 = sbr.rel (%p681) target = $region36
        $region35: #{tpu_custom_call.1} parent=31 // pred_region
          %s684 = smul.u32 2, %s17
          %s686 = ssub.s32 256, 256
          %687 = vsyncadd %s677, %s686
          %s688 = smul.addr %s684, 128
          %s689 = scalar_lea.hbm %s3, %s688
          %s690 = sshll.u32 %s680, 4
          %s691 = int_to_ptr.vmem [resolvable:$true] %s690
          %696 = dma.vmem_to_hbm [thread:$0]  %s691, 256, %s689, %s677, 128, 128, 8
        $region36: #{tpu_custom_call.1} parent=31 // pred_fallthru
          _
      $region32: #{tpu_custom_call.1} parent=5 // pred_fallthru
        _
      %p697 = scmp.le.s32.totalorder 2, %s12
      // Predicated region
      $region37: #{tpu_custom_call.1} parent=5 // pred_check
        %p698 = pneg %p697
      $region38: #{tpu_custom_call.1} parent=5 // pred_check_branch
        %700 = sbr.rel (%p698) target = $region40
      $region39: #{tpu_custom_call.1} parent=5 // pred_region
        %s701 = ssub.s32 %s12, 2
        // Predicated region
        $region41: #{tpu_custom_call.1} parent=39 // pred_check
          %p702 = pneg %p109
        $region42: #{tpu_custom_call.1} parent=39 // pred_check_branch
          %704 = sbr.rel (%p702) target = $region44
        $region43: #{tpu_custom_call.1} parent=39 // pred_region
          %s705 = sand.u32 %s94, 1
          %s706 = scalar_lea.sflag [#allocation3], %s705
          %s707 = sand.u32 %s94, 1
          %s708 = smul.addr %s707, 16
          %s709 = scalar_lea.vmem [#allocation2], %s708
          %710 = dma.done %s706, 256
        $region44: #{tpu_custom_call.1} parent=39 // pred_fallthru
          _
      $region40: #{tpu_custom_call.1} parent=5 // pred_fallthru
        _
    $region6: #{tpu_custom_call.1} parent=1 // loop_footer
      %s16 = sadd.s32 1, %s12
    $region7: #{tpu_custom_call.1} parent=1 // loop_footer_branch
      %11 = sbr.rel target = $region3
    $region8: #{tpu_custom_call.1} parent=1 // loop_exit
      _
    %711 = vsyncpa [#allocation3], 1
    %s712 = scalar_lea.sflag [#allocation3], 1
    %713 = vsyncpa %s712, 1

</llo_original>
